<compile_context>
chip_gen: v7x
topology: tpu7x:2x2x1
jax: 0.10.0
libtpu: 0.0.40
codegen_flags: <defaults>
</compile_context>

<pallas_src>
import functools

import jax
import jax.numpy as jnp
from jax.experimental import pallas as pl
from jax.experimental.pallas import tpu as pltpu


def _sigmoid_f32(x):
    # exp on the EUP, approximate reciprocal on the EUP -> VALU slot stays free.
    return pl.reciprocal(1.0 + jnp.exp(-x), approx=True)


def _gate_fusion_kernel(s_ref, v_ref, w1s_ref, w1v_ref, b1_ref,
                        w2_ref, b2_ref, o_ref, *, dot_dtype):
    s = s_ref[...]
    v = v_ref[...]

    # Matmul operands in the MXU-native dtype (bf16 by default), f32 accumulate.
    s_d = s.astype(dot_dtype)
    v_d = v.astype(dot_dtype)

    # Linear(2D -> 2D) with the concat folded into two matmuls.
    h1 = (jnp.dot(s_d, w1s_ref[...], preferred_element_type=jnp.float32)
          + jnp.dot(v_d, w1v_ref[...], preferred_element_type=jnp.float32)
          + b1_ref[...].astype(jnp.float32))

    # SiLU in f32 on the VPU/EUP.
    a = h1 * _sigmoid_f32(h1)

    # Linear(2D -> d_f) + Sigmoid.
    g = _sigmoid_f32(
        jnp.dot(a.astype(dot_dtype), w2_ref[...],
                preferred_element_type=jnp.float32)
        + b2_ref[...].astype(jnp.float32))

    # Gated fusion in f32, cast once on store.
    s_f = s.astype(jnp.float32)
    v_f = v.astype(jnp.float32)
    o_ref[...] = (g * s_f + (1.0 - g) * v_f).astype(o_ref.dtype)


def _round_up(x, m):
    return ((x + m - 1) // m) * m


def gate_fusion(s_emb, v_emb, params, *, row_tile=512,
                dot_dtype=jnp.bfloat16, vmem_limit_bytes=64 * 1024 * 1024):
    """Apply GateFusionOp. s_emb/v_emb: (..., D). Returns (..., D)."""
    w1, b1, w2, b2 = params["w1"], params["b1"], params["w2"], params["b2"]
    D = s_emb.shape[-1]
    assert v_emb.shape == s_emb.shape
    d_f = w2.shape[-1]
    assert d_f == D, "d_f must equal embedding dim for the elementwise gate"

    orig_shape = s_emb.shape
    s2 = s_emb.reshape(-1, D)
    v2 = v_emb.reshape(-1, D)
    N = s2.shape[0]

    # Row tile: multiple of 8, no larger than the (rounded-up) row count.
    rt = max(8, min(_round_up(row_tile, 8), _round_up(N, 8)))
    grid = (pl.cdiv(N, rt),)

    # Fold the concat: split W1 into the part acting on s and the part on v,
    # and pre-cast weights to the matmul dtype once (stays resident in VMEM).
    w1s = w1[:D, :].astype(dot_dtype)          # (D, 2D)
    w1v = w1[D:, :].astype(dot_dtype)          # (D, 2D)
    w2c = w2.astype(dot_dtype)                 # (2D, d_f)
    b1r = b1.reshape(1, -1).astype(jnp.float32)  # (1, 2D)
    b2r = b2.reshape(1, -1).astype(jnp.float32)  # (1, d_f)

    two_d = 2 * D

    kernel = functools.partial(_gate_fusion_kernel, dot_dtype=dot_dtype)

    out = pl.pallas_call(
        kernel,
        out_shape=jax.ShapeDtypeStruct((N, D), s_emb.dtype),
        grid_spec=pltpu.PrefetchScalarGridSpec(
            num_scalar_prefetch=0,
            grid=grid,
            in_specs=[
                pl.BlockSpec((rt, D),      lambda i: (i, 0)),   # s rows
                pl.BlockSpec((rt, D),      lambda i: (i, 0)),   # v rows
                pl.BlockSpec((D, two_d),   lambda i: (0, 0)),   # W1[:D]
                pl.BlockSpec((D, two_d),   lambda i: (0, 0)),   # W1[D:]
                pl.BlockSpec((1, two_d),   lambda i: (0, 0)),   # b1
                pl.BlockSpec((two_d, d_f), lambda i: (0, 0)),   # W2
                pl.BlockSpec((1, d_f),     lambda i: (0, 0)),   # b2
            ],
            out_specs=pl.BlockSpec((rt, D), lambda i: (i, 0)),
        ),
        compiler_params=pltpu.CompilerParams(
            dimension_semantics=("parallel",),
            vmem_limit_bytes=vmem_limit_bytes),
    )(s2, v2, w1s, w1v, b1r, w2c, b2r)

    return out.reshape(orig_shape)


def init_params(key, d_emb, d_f, dtype=jnp.float32):
    """Deterministic synthetic params matching nn.Linear shapes.
    W stored as (in, out) = transposed PyTorch layout."""
    two_d = 2 * d_emb
    k1, k2, k3, k4 = jax.random.split(key, 4)
    lim1 = 1.0 / (two_d ** 0.5)
    lim2 = 1.0 / (two_d ** 0.5)
    return {
        "w1": jax.random.uniform(k1, (two_d, two_d), dtype, -lim1, lim1),
        "b1": jax.random.uniform(k2, (two_d,), dtype, -lim1, lim1),
        "w2": jax.random.uniform(k3, (two_d, d_f), dtype, -lim2, lim2),
        "b2": jax.random.uniform(k4, (d_f,), dtype, -lim2, lim2),
    }


def _reference(s_emb, v_emb, params, dot_dtype=jnp.bfloat16):
    """Pure-JAX reference mirroring the kernel's numerics
    (bf16 matmul operands, f32 accumulation and elementwise)."""
    D = s_emb.shape[-1]
    w1 = params["w1"].astype(dot_dtype)
    w2 = params["w2"].astype(dot_dtype)
    s2 = s_emb.reshape(-1, D)
    v2 = v_emb.reshape(-1, D)
    h1 = (jnp.dot(s2.astype(dot_dtype), w1[:D],
                  preferred_element_type=jnp.float32)
          + jnp.dot(v2.astype(dot_dtype), w1[D:],
                    preferred_element_type=jnp.float32)
          + params["b1"].astype(jnp.float32))
    a = jax.nn.silu(h1)
    g = jax.nn.sigmoid(
        jnp.dot(a.astype(dot_dtype), w2, preferred_element_type=jnp.float32)
        + params["b2"].astype(jnp.float32))
    g = g.reshape(s_emb.shape)
    return (g * s_emb + (1.0 - g) * v_emb).astype(s_emb.dtype)


if __name__ == "__main__":
    B, S, D = 2, 8, 32      # batch=2, seq=8, hidden=32 ; d_s_emb=d_v_emb=d_f=D
    key = jax.random.PRNGKey(0)
    k_s, k_v, k_p = jax.random.split(key, 3)

    s_emb = jax.random.normal(k_s, (B, S, D), jnp.float32)
    v_emb = jax.random.normal(k_v, (B, S, D), jnp.float32)
    params = init_params(k_p, d_emb=D, d_f=D)

    out = gate_fusion(s_emb, v_emb, params)
    out = jax.block_until_ready(out)

    ref = _reference(s_emb, v_emb, params)
    assert out.shape == (B, S, D)
    # bf16 matmul operands + approx reciprocal -> compare with matching-numerics
    # reference at a tolerance that covers the approx-sigmoid delta.
    assert jnp.allclose(out, ref, atol=2e-2, rtol=2e-2), "mismatch vs reference"

    print("KERNEL_OK")
</pallas_src>

<mosaic_0001>
module attributes {stable_mosaic.version = 11 : i64} {
  func.func @_gate_fusion_kernel(%arg0: i32, %arg1: memref<16x32xf32, #tpu.memory_space<vmem>>, %arg2: memref<16x32xf32, #tpu.memory_space<vmem>>, %arg3: memref<32x64xbf16, #tpu.memory_space<vmem>>, %arg4: memref<32x64xbf16, #tpu.memory_space<vmem>>, %arg5: memref<1x64xf32, #tpu.memory_space<vmem>>, %arg6: memref<64x32xbf16, #tpu.memory_space<vmem>>, %arg7: memref<1x32xf32, #tpu.memory_space<vmem>>, %arg8: memref<16x32xf32, #tpu.memory_space<vmem>>) attributes {dimension_semantics = [#tpu.dimension_semantics<parallel>], iteration_bounds = array<i64: 1>, scalar_prefetch = 0 : i64, scratch_operands = 0 : i64, tpu.core_type = #tpu.core_type<tc>, window_params = [{transform_indices = @transform_0, window_bounds = array<i64: 16, 32>}, {transform_indices = @transform_1, window_bounds = array<i64: 16, 32>}, {pipeline_mode = #tpu.pipeline_mode<synchronous>, transform_indices = @transform_2, window_bounds = array<i64: 32, 64>}, {pipeline_mode = #tpu.pipeline_mode<synchronous>, transform_indices = @transform_3, window_bounds = array<i64: 32, 64>}, {pipeline_mode = #tpu.pipeline_mode<synchronous>, transform_indices = @transform_4, window_bounds = array<i64: 1, 64>}, {pipeline_mode = #tpu.pipeline_mode<synchronous>, transform_indices = @transform_5, window_bounds = array<i64: 64, 32>}, {pipeline_mode = #tpu.pipeline_mode<synchronous>, transform_indices = @transform_6, window_bounds = array<i64: 1, 32>}, {transform_indices = @transform_7, window_bounds = array<i64: 16, 32>}]} {
    %c0 = arith.constant 0 : index
    %c0_0 = arith.constant 0 : index
    %0 = vector.load %arg1[%c0, %c0_0] : memref<16x32xf32, #tpu.memory_space<vmem>>, vector<16x32xf32>
    %c0_1 = arith.constant 0 : index
    %c0_2 = arith.constant 0 : index
    %1 = vector.load %arg2[%c0_1, %c0_2] : memref<16x32xf32, #tpu.memory_space<vmem>>, vector<16x32xf32>
    %2 = arith.truncf %0 : vector<16x32xf32> to vector<16x32xbf16>
    %3 = arith.truncf %1 : vector<16x32xf32> to vector<16x32xbf16>
    %c0_3 = arith.constant 0 : index
    %c0_4 = arith.constant 0 : index
    %4 = vector.load %arg3[%c0_3, %c0_4] : memref<32x64xbf16, #tpu.memory_space<vmem>>, vector<32x64xbf16>
    %cst = arith.constant dense<0.000000e+00> : vector<16x64xf32>
    %5 = tpu.matmul %2, %4, %cst {dimension_numbers = #tpu.dot_dimension_numbers<[1], [0], [0], [1], [0, 0, 1, 1], [], []>} : vector<16x32xbf16>, vector<32x64xbf16>, vector<16x64xf32> -> vector<16x64xf32>
    %c0_5 = arith.constant 0 : index
    %c0_6 = arith.constant 0 : index
    %6 = vector.load %arg4[%c0_5, %c0_6] : memref<32x64xbf16, #tpu.memory_space<vmem>>, vector<32x64xbf16>
    %cst_7 = arith.constant dense<0.000000e+00> : vector<16x64xf32>
    %7 = tpu.matmul %3, %6, %cst_7 {dimension_numbers = #tpu.dot_dimension_numbers<[1], [0], [0], [1], [0, 0, 1, 1], [], []>} : vector<16x32xbf16>, vector<32x64xbf16>, vector<16x64xf32> -> vector<16x64xf32>
    %8 = arith.addf %5, %7 : vector<16x64xf32>
    %c0_8 = arith.constant 0 : index
    %c0_9 = arith.constant 0 : index
    %9 = vector.load %arg5[%c0_8, %c0_9] : memref<1x64xf32, #tpu.memory_space<vmem>>, vector<1x64xf32>
    %10 = vector.broadcast %9 : vector<1x64xf32> to vector<16x64xf32>
    %11 = arith.addf %8, %10 : vector<16x64xf32>
    %cst_10 = arith.constant 0.000000e+00 : f32
    %12 = vector.broadcast %cst_10 : f32 to vector<16x64xf32>
    %13 = arith.subf %12, %11 : vector<16x64xf32>
    %14 = math.exp %13 : vector<16x64xf32>
    %cst_11 = arith.constant 1.000000e+00 : f32
    %15 = vector.broadcast %cst_11 : f32 to vector<16x64xf32>
    %16 = arith.addf %15, %14 : vector<16x64xf32>
    %17 = tpu.reciprocal %16 {approx = true} : vector<16x64xf32> -> vector<16x64xf32>
    %18 = arith.mulf %11, %17 : vector<16x64xf32>
    %19 = arith.truncf %18 : vector<16x64xf32> to vector<16x64xbf16>
    %c0_12 = arith.constant 0 : index
    %c0_13 = arith.constant 0 : index
    %20 = vector.load %arg6[%c0_12, %c0_13] : memref<64x32xbf16, #tpu.memory_space<vmem>>, vector<64x32xbf16>
    %cst_14 = arith.constant dense<0.000000e+00> : vector<16x32xf32>
    %21 = tpu.matmul %19, %20, %cst_14 {dimension_numbers = #tpu.dot_dimension_numbers<[1], [0], [0], [1], [0, 0, 1, 1], [], []>} : vector<16x64xbf16>, vector<64x32xbf16>, vector<16x32xf32> -> vector<16x32xf32>
    %c0_15 = arith.constant 0 : index
    %c0_16 = arith.constant 0 : index
    %22 = vector.load %arg7[%c0_15, %c0_16] : memref<1x32xf32, #tpu.memory_space<vmem>>, vector<1x32xf32>
    %23 = vector.broadcast %22 : vector<1x32xf32> to vector<16x32xf32>
    %24 = arith.addf %21, %23 : vector<16x32xf32>
    %cst_17 = arith.constant 0.000000e+00 : f32
    %25 = vector.broadcast %cst_17 : f32 to vector<16x32xf32>
    %26 = arith.subf %25, %24 : vector<16x32xf32>
    %27 = math.exp %26 : vector<16x32xf32>
    %cst_18 = arith.constant 1.000000e+00 : f32
    %28 = vector.broadcast %cst_18 : f32 to vector<16x32xf32>
    %29 = arith.addf %28, %27 : vector<16x32xf32>
    %30 = tpu.reciprocal %29 {approx = true} : vector<16x32xf32> -> vector<16x32xf32>
    %31 = arith.mulf %30, %0 : vector<16x32xf32>
    %cst_19 = arith.constant 1.000000e+00 : f32
    %32 = vector.broadcast %cst_19 : f32 to vector<16x32xf32>
    %33 = arith.subf %32, %30 : vector<16x32xf32>
    %34 = arith.mulf %33, %1 : vector<16x32xf32>
    %35 = arith.addf %31, %34 : vector<16x32xf32>
    %c0_20 = arith.constant 0 : index
    %c0_21 = arith.constant 0 : index
    %36 = vector.load %arg8[%c0_20, %c0_21] : memref<16x32xf32, #tpu.memory_space<vmem>>, vector<16x32xf32>
    tpu.vector_store %arg8[%c0_20, %c0_21], %35 {strides = array<i32>} : memref<16x32xf32, #tpu.memory_space<vmem>>, vector<16x32xf32>,
    return
  }
  func.func @transform_0(%arg0: i32) -> (i32, i32) {
    %c0_i32 = arith.constant 0 : i32
    %c0_i32_0 = arith.constant 0 : i32
    return %arg0, %c0_i32 : i32, i32
  }
  func.func @transform_1(%arg0: i32) -> (i32, i32) {
    %c0_i32 = arith.constant 0 : i32
    %c0_i32_0 = arith.constant 0 : i32
    return %arg0, %c0_i32 : i32, i32
  }
  func.func @transform_2(%arg0: i32) -> (i32, i32) {
    %c0_i32 = arith.constant 0 : i32
    %c0_i32_0 = arith.constant 0 : i32
    %c0_i32_1 = arith.constant 0 : i32
    return %c0_i32, %c0_i32_0 : i32, i32
  }
  func.func @transform_3(%arg0: i32) -> (i32, i32) {
    %c0_i32 = arith.constant 0 : i32
    %c0_i32_0 = arith.constant 0 : i32
    %c0_i32_1 = arith.constant 0 : i32
    return %c0_i32, %c0_i32_0 : i32, i32
  }
  func.func @transform_4(%arg0: i32) -> (i32, i32) {
    %c0_i32 = arith.constant 0 : i32
    %c0_i32_0 = arith.constant 0 : i32
    %c0_i32_1 = arith.constant 0 : i32
    return %c0_i32, %c0_i32_0 : i32, i32
  }
  func.func @transform_5(%arg0: i32) -> (i32, i32) {
    %c0_i32 = arith.constant 0 : i32
    %c0_i32_0 = arith.constant 0 : i32
    %c0_i32_1 = arith.constant 0 : i32
    return %c0_i32, %c0_i32_0 : i32, i32
  }
  func.func @transform_6(%arg0: i32) -> (i32, i32) {
    %c0_i32 = arith.constant 0 : i32
    %c0_i32_0 = arith.constant 0 : i32
    %c0_i32_1 = arith.constant 0 : i32
    return %c0_i32, %c0_i32_0 : i32, i32
  }
  func.func @transform_7(%arg0: i32) -> (i32, i32) {
    %c0_i32 = arith.constant 0 : i32
    %c0_i32_0 = arith.constant 0 : i32
    return %arg0, %c0_i32 : i32, i32
  }
}

</mosaic_0001>

<llo_original>
// kernel: tpu_custom_call.1
$region0: #{tpu_custom_call.1}
  #allocation0 [shape = 'u32[]', space=smem, size = 0x4, offset = 0x4, fixed_abs, tag = 'smem constant byte address 0x4 - core index']
  #allocation1 [shape = 'u32[144,128]{1,0:T(1,128)}', space=vmem, size = 0x12000, scoped, tag = 'internal scratch']
  %s0 = inlined_call_operand.hbm [shape: f32[16,32], index: 0, kind: input, shape index: {}]
  %s1 = inlined_call_operand.hbm [shape: f32[16,32], index: 1, kind: input, shape index: {}]
  %s2 = inlined_call_operand.hbm [shape: bf16[32,64], index: 2, kind: input, shape index: {}]
  %s3 = inlined_call_operand.hbm [shape: bf16[32,64], index: 3, kind: input, shape index: {}]
  %s4 = inlined_call_operand.hbm [shape: f32[1,64], index: 4, kind: input, shape index: {}]
  %s5 = inlined_call_operand.hbm [shape: bf16[64,32], index: 5, kind: input, shape index: {}]
  %s6 = inlined_call_operand.hbm [shape: f32[1,32], index: 6, kind: input, shape index: {}]
  %s7 = inlined_call_operand.hbm [shape: f32[16,32], index: 7, kind: output, shape index: {}]
  %s8 = sld [smem:[#allocation0]]
  $region66: #{tpu_custom_call.1} parent=0
    _
  %s10 = ssub.s32 1, %s8
  %s11 = scalar_select 0, %s10, %s8
  $region1: #{tpu_custom_call.1} parent=0
    #allocation2 [shape = 'u8[8192]{0}', space=vmem, size = 0x2000, scoped, tag = 'input window, operand 0, single buffered']
    #allocation3 [shape = 's32[1]{0}', space=sflag, size = 0x4, scoped, tag = 'scoped memory for tpu_custom_call.1']
    #allocation4 [shape = 's32[1]{0}', space=sflag, size = 0x4, scoped, tag = 'scoped memory for tpu_custom_call.1']
    #allocation5 [shape = 'u8[8192]{0}', space=vmem, size = 0x2000, scoped, tag = 'input window, operand 1, single buffered']
    #allocation6 [shape = 's32[1]{0}', space=sflag, size = 0x4, scoped, tag = 'scoped memory for tpu_custom_call.1']
    #allocation7 [shape = 'u8[8192]{0}', space=vmem, size = 0x2000, scoped, tag = 'input window, operand 2, single buffered']
    #allocation8 [shape = 'u8[8192]{0}', space=vmem, size = 0x2000, scoped, tag = 'input window, operand 3, single buffered']
    #allocation9 [shape = 's32[1]{0}', space=sflag, size = 0x4, scoped, tag = 'scoped memory for tpu_custom_call.1']
    #allocation10 [shape = 'u8[512]{0}', space=vmem, size = 0x400, scoped, tag = 'input window, operand 4, single buffered']
    #allocation11 [shape = 'u8[16384]{0}', space=vmem, size = 0x4000, scoped, tag = 'input window, operand 5, single buffered']
    #allocation12 [shape = 's32[1]{0}', space=sflag, size = 0x4, scoped, tag = 'scoped memory for tpu_custom_call.1']
    #allocation13 [shape = 'u8[512]{0}', space=vmem, size = 0x400, scoped, tag = 'input window, operand 6, single buffered']
    #allocation14 [shape = 'u8[8192]{0}', space=vmem, size = 0x2000, scoped, tag = 'output window, operand 0, single buffered']
    %12 = vsyncpa [#allocation3], 0
    %13 = vsyncpa [#allocation6], 0
    %14 = vsyncpa [#allocation9], 0
    %15 = vsyncpa [#allocation12], 0
    %16 = vsyncpa [#allocation4], 0
    // Predicated region
    $region2: #{tpu_custom_call.1} parent=1 // pred_check
      _
    $region3: #{tpu_custom_call.1} parent=1 // pred_check_branch
      %18 = sbr.rel (0) target = $region5
    $region4: #{tpu_custom_call.1} parent=1 // pred_region
      %s20 = ssub.s32 256, 256
      %21 = vsyncadd [#allocation3], %s20
      %s22 = sshll.u32 [#allocation2], 4
      %s23 = int_to_ptr.vmem [resolvable:$true] %s22
      %28 = dma.hbm_to_vmem [thread:$0]  %s0, 256, %s23, [#allocation3], 128, 128, 8
    $region5: #{tpu_custom_call.1} parent=1 // pred_fallthru
      _
    // Predicated region
    $region6: #{tpu_custom_call.1} parent=1 // pred_check
      _
    $region7: #{tpu_custom_call.1} parent=1 // pred_check_branch
      %30 = sbr.rel (0) target = $region9
    $region8: #{tpu_custom_call.1} parent=1 // pred_region
      %s32 = ssub.s32 256, 256
      %33 = vsyncadd [#allocation6], %s32
      %s34 = sshll.u32 [#allocation5], 4
      %s35 = int_to_ptr.vmem [resolvable:$true] %s34
      %40 = dma.hbm_to_vmem [thread:$0]  %s1, 256, %s35, [#allocation6], 128, 128, 8
    $region9: #{tpu_custom_call.1} parent=1 // pred_fallthru
      _
    // Predicated region
    $region10: #{tpu_custom_call.1} parent=1 // pred_check
      _
    $region11: #{tpu_custom_call.1} parent=1 // pred_check_branch
      %42 = sbr.rel (0) target = $region13
    $region12: #{tpu_custom_call.1} parent=1 // pred_region
      %s44 = ssub.s32 256, 256
      %45 = vsyncadd [#allocation6], %s44
      %s46 = sshll.u32 [#allocation7], 4
      %s47 = int_to_ptr.vmem [resolvable:$true] %s46
      %52 = dma.hbm_to_vmem [thread:$0]  %s2, 256, %s47, [#allocation6], 64, 64, 4
    $region13: #{tpu_custom_call.1} parent=1 // pred_fallthru
      _
    // Predicated region
    $region14: #{tpu_custom_call.1} parent=1 // pred_check
      _
    $region15: #{tpu_custom_call.1} parent=1 // pred_check_branch
      %54 = sbr.rel (0) target = $region17
    $region16: #{tpu_custom_call.1} parent=1 // pred_region
      %s56 = ssub.s32 256, 256
      %57 = vsyncadd [#allocation9], %s56
      %s58 = sshll.u32 [#allocation8], 4
      %s59 = int_to_ptr.vmem [resolvable:$true] %s58
      %64 = dma.hbm_to_vmem [thread:$0]  %s3, 256, %s59, [#allocation9], 64, 64, 4
    $region17: #{tpu_custom_call.1} parent=1 // pred_fallthru
      _
    // Predicated region
    $region18: #{tpu_custom_call.1} parent=1 // pred_check
      _
    $region19: #{tpu_custom_call.1} parent=1 // pred_check_branch
      %66 = sbr.rel (0) target = $region21
    $region20: #{tpu_custom_call.1} parent=1 // pred_region
      %s68 = ssub.s32 16, 16
      %69 = vsyncadd [#allocation9], %s68
      %s71 = sshll.u32 [#allocation10], 4
      %s72 = int_to_ptr.vmem [resolvable:$true] %s71
      %74 = dma.hbm_to_vmem [thread:$0]  %s4, 16, %s72, [#allocation9]
    $region21: #{tpu_custom_call.1} parent=1 // pred_fallthru
      _
    // Predicated region
    $region22: #{tpu_custom_call.1} parent=1 // pred_check
      _
    $region23: #{tpu_custom_call.1} parent=1 // pred_check_branch
      %76 = sbr.rel (0) target = $region25
    $region24: #{tpu_custom_call.1} parent=1 // pred_region
      %s78 = ssub.s32 512, 512
      %79 = vsyncadd [#allocation12], %s78
      %s80 = sshll.u32 [#allocation11], 4
      %s81 = int_to_ptr.vmem [resolvable:$true] %s80
      %86 = dma.hbm_to_vmem [thread:$0]  %s5, 512, %s81, [#allocation12], 64, 64, 4
    $region25: #{tpu_custom_call.1} parent=1 // pred_fallthru
      _
    // Predicated region
    $region26: #{tpu_custom_call.1} parent=1 // pred_check
      _
    $region27: #{tpu_custom_call.1} parent=1 // pred_check_branch
      %88 = sbr.rel (0) target = $region29
    $region28: #{tpu_custom_call.1} parent=1 // pred_region
      %s90 = ssub.s32 16, 16
      %91 = vsyncadd [#allocation12], %s90
      %s93 = sshll.u32 [#allocation13], 4
      %s94 = int_to_ptr.vmem [resolvable:$true] %s93
      %96 = dma.hbm_to_vmem [thread:$0]  %s6, 16, %s94, [#allocation12]
    $region29: #{tpu_custom_call.1} parent=1 // pred_fallthru
      _
    // Predicated region
    $region30: #{tpu_custom_call.1} parent=1 // pred_check
      _
    $region31: #{tpu_custom_call.1} parent=1 // pred_check_branch
      %98 = sbr.rel (0) target = $region33
    $region32: #{tpu_custom_call.1} parent=1 // pred_region
      %99 = dma.done [#allocation3], 256
    $region33: #{tpu_custom_call.1} parent=1 // pred_fallthru
      _
    // Predicated region
    $region34: #{tpu_custom_call.1} parent=1 // pred_check
      _
    $region35: #{tpu_custom_call.1} parent=1 // pred_check_branch
      %101 = sbr.rel (0) target = $region37
    $region36: #{tpu_custom_call.1} parent=1 // pred_region
      %102 = dma.done [#allocation6], 256
    $region37: #{tpu_custom_call.1} parent=1 // pred_fallthru
      _
    // Predicated region
    $region38: #{tpu_custom_call.1} parent=1 // pred_check
      _
    $region39: #{tpu_custom_call.1} parent=1 // pred_check_branch
      %104 = sbr.rel (0) target = $region41
    $region40: #{tpu_custom_call.1} parent=1 // pred_region
      %105 = dma.done [#allocation6], 256
    $region41: #{tpu_custom_call.1} parent=1 // pred_fallthru
      _
    // Predicated region
    $region42: #{tpu_custom_call.1} parent=1 // pred_check
      _
    $region43: #{tpu_custom_call.1} parent=1 // pred_check_branch
      %107 = sbr.rel (0) target = $region45
    $region44: #{tpu_custom_call.1} parent=1 // pred_region
      %108 = dma.done [#allocation9], 256
    $region45: #{tpu_custom_call.1} parent=1 // pred_fallthru
      _
    // Predicated region
    $region46: #{tpu_custom_call.1} parent=1 // pred_check
      _
    $region47: #{tpu_custom_call.1} parent=1 // pred_check_branch
      %110 = sbr.rel (0) target = $region49
    $region48: #{tpu_custom_call.1} parent=1 // pred_region
      %111 = dma.done [#allocation9], 16
    $region49: #{tpu_custom_call.1} parent=1 // pred_fallthru
      _
    // Predicated region
    $region50: #{tpu_custom_call.1} parent=1 // pred_check
      _
    $region51: #{tpu_custom_call.1} parent=1 // pred_check_branch
      %113 = sbr.rel (0) target = $region53
    $region52: #{tpu_custom_call.1} parent=1 // pred_region
      %114 = dma.done [#allocation12], 512
    $region53: #{tpu_custom_call.1} parent=1 // pred_fallthru
      _
    // Predicated region
    $region54: #{tpu_custom_call.1} parent=1 // pred_check
      _
    $region55: #{tpu_custom_call.1} parent=1 // pred_check_branch
      %116 = sbr.rel (0) target = $region57
    $region56: #{tpu_custom_call.1} parent=1 // pred_region
      %117 = dma.done [#allocation12], 16
    $region57: #{tpu_custom_call.1} parent=1 // pred_fallthru
      _
    %v119 = vld [vmem:[#allocation2] sm:$0xff]
    %v120 = vld [vmem:[#allocation2 + $0x8] sm:$0xff]
    %v121 = vld [vmem:[#allocation5] sm:$0xff]
    %v122 = vld [vmem:[#allocation5 + $0x8] sm:$0xff]
    %v123 = vpack.c.bf16 %v120, %v119
    %v124 = vpack.c.bf16 %v122, %v121
    %v125 = vld [vmem:[#allocation7] sm:$0xf]
    %v126 = vld [vmem:[#allocation7 + $0x4] sm:$0xf]
    %v127 = vld [vmem:[#allocation7 + $0x8] sm:$0xf]
    %v128 = vld [vmem:[#allocation7 + $0xc] sm:$0xf]
    %v129 = vld [vmem:[#allocation8] sm:$0xf]
    %v130 = vld [vmem:[#allocation8 + $0x4] sm:$0xf]
    %v131 = vld [vmem:[#allocation8 + $0x8] sm:$0xf]
    %v132 = vld [vmem:[#allocation8 + $0xc] sm:$0xf]
    %v137 = vunpack.c.l.b16 %v129
    %v138 = vunpack.c.l.b16 %v130
    %v139 = vunpack.c.l.b16 %v131
    %v140 = vunpack.c.l.b16 %v132
    %v141 = vpack.c.b16 %v138, %v137
    %v142 = vpack.c.b16 %v140, %v139
    %vm145 = vcmask 261120
    %v147 = vsel %vm145, %v124, 0
    %149 = vmatprep.subr.bf16.mxu0 0
    %150 = vmatpush1.bf16.msra.mxu0 %v141
    %151 = vmatprep.subr.bf16.mxu0 0
    %152 = vmatpush1.bf16.msra.mxu0 %v142
    %153 = vmatprep.subr.bf16.mxu0 0
    %154 = vmatpush1.bf16.msra.mxu0 0
    %155 = vmatprep.subr.bf16.mxu0 0
    %156 = vmatpush1.bf16.msra.mxu0 0
    %157 = vmatprep.subr.bf16.mxu0 0
    %158 = vmatpush1.bf16.msra.mxu0 0
    %159 = vmatprep.subr.bf16.mxu0 0
    %160 = vmatpush1.bf16.msra.mxu0 0
    %161 = vmatprep.subr.bf16.mxu0 0
    %162 = vmatpush1.bf16.msra.mxu0 0
    %163 = vmatprep.subr.bf16.mxu0 0
    %164 = vmatpush1.bf16.msra.mxu0 0
    %165 = vmatprep.subr.bf16.mxu0 0
    %166 = vmatpush1.bf16.msra.mxu0 0
    %167 = vmatprep.subr.bf16.mxu0 0
    %168 = vmatpush1.bf16.msra.mxu0 0
    %169 = vmatprep.subr.bf16.mxu0 0
    %170 = vmatpush1.bf16.msra.mxu0 0
    %171 = vmatprep.subr.bf16.mxu0 0
    %172 = vmatpush1.bf16.msra.mxu0 0
    %173 = vmatprep.subr.bf16.mxu0 0
    %174 = vmatpush1.bf16.msra.mxu0 0
    %175 = vmatprep.subr.bf16.mxu0 0
    %176 = vmatpush1.bf16.msra.mxu0 0
    %177 = vmatprep.subr.bf16.mxu0 0
    %178 = vmatpush1.bf16.msra.mxu0 0
    %179 = vmatprep.subr.bf16.mxu0 0
    %180 = vmatpush1.bf16.msra.mxu0 0
    %181 = vmatprep.mubr.bf16.mxu0 0
    %182 = vmatmul.mubr.bf16.gmra.mrb[0].mxu0 %v147
    %v183 = vpop.f32.mrb[0].mxu0
    %v184 = vadd.f32 0.0, %v183
    %v185 = vpop.f32.mrb[0].mxu0
    %v186 = vpop.f32.mrb[0].mxu0
    %v187 = vadd.f32 0.0, %v186
    %v188 = vpop.f32.mrb[0].mxu0
    %189 = vdwg.mxu0
    %v194 = vunpack.c.l.b16 %v125
    %v195 = vunpack.c.l.b16 %v126
    %v196 = vunpack.c.l.b16 %v127
    %v197 = vunpack.c.l.b16 %v128
    %v198 = vpack.c.b16 %v195, %v194
    %v199 = vpack.c.b16 %v197, %v196
    %v203 = vsel %vm145, %v123, 0
    %205 = vmatprep.subr.bf16.mxu0 0
    %206 = vmatpush1.bf16.msra.mxu0 %v198
    %207 = vmatprep.subr.bf16.mxu0 0
    %208 = vmatpush1.bf16.msra.mxu0 %v199
    %209 = vmatprep.subr.bf16.mxu0 0
    %210 = vmatpush1.bf16.msra.mxu0 0
    %211 = vmatprep.subr.bf16.mxu0 0
    %212 = vmatpush1.bf16.msra.mxu0 0
    %213 = vmatprep.subr.bf16.mxu0 0
    %214 = vmatpush1.bf16.msra.mxu0 0
    %215 = vmatprep.subr.bf16.mxu0 0
    %216 = vmatpush1.bf16.msra.mxu0 0
    %217 = vmatprep.subr.bf16.mxu0 0
    %218 = vmatpush1.bf16.msra.mxu0 0
    %219 = vmatprep.subr.bf16.mxu0 0
    %220 = vmatpush1.bf16.msra.mxu0 0
    %221 = vmatprep.subr.bf16.mxu0 0
    %222 = vmatpush1.bf16.msra.mxu0 0
    %223 = vmatprep.subr.bf16.mxu0 0
    %224 = vmatpush1.bf16.msra.mxu0 0
    %225 = vmatprep.subr.bf16.mxu0 0
    %226 = vmatpush1.bf16.msra.mxu0 0
    %227 = vmatprep.subr.bf16.mxu0 0
    %228 = vmatpush1.bf16.msra.mxu0 0
    %229 = vmatprep.subr.bf16.mxu0 0
    %230 = vmatpush1.bf16.msra.mxu0 0
    %231 = vmatprep.subr.bf16.mxu0 0
    %232 = vmatpush1.bf16.msra.mxu0 0
    %233 = vmatprep.subr.bf16.mxu0 0
    %234 = vmatpush1.bf16.msra.mxu0 0
    %235 = vmatprep.subr.bf16.mxu0 0
    %236 = vmatpush1.bf16.msra.mxu0 0
    %237 = vmatprep.mubr.bf16.mxu0 0
    %238 = vmatmul.mubr.bf16.gmra.mrb[0].mxu0 %v203
    %v239 = vpop.f32.mrb[0].mxu0
    %v240 = vadd.f32 %v184, %v239
    %v241 = vpop.f32.mrb[0].mxu0
    %v242 = vpop.f32.mrb[0].mxu0
    %v243 = vadd.f32 %v187, %v242
    %v244 = vpop.f32.mrb[0].mxu0
    %245 = vdwg.mxu0
    %v246 = vld [vmem:[#allocation10] sm:$0x1]
    %v248 = vlaneseq
    %v249 = vshrl.u32 %v248, 7
    %v250 = vsub.s32 0, %v249
    %v251 = vrot.slane %v246, %v250
    %v253 = vadd.f32 %v240, %v251
    %v254 = vadd.f32 %v243, %v251
    %v255 = vsub.f32 0.0, %v253
    %v256 = vsub.f32 0.0, %v254
    %v257 = vmul.f32 %v255, 1.442695
    %v258 = vpow.pop %v257
    %v259 = vmul.f32 %v256, 1.442695
    %v260 = vpow.pop %v259
    %v261 = vadd.f32 %v258, 1.0
    %v262 = vadd.f32 %v260, 1.0
    %v263 = vrcp.pop %v261
    %v264 = vrcp.pop %v262
    %v265 = vmul.f32 %v253, %v263
    %v266 = vmul.f32 %v254, %v264
    %v267 = vpack.c.bf16 %v266, %v265
    %v268 = vld [vmem:[#allocation11] sm:$0xf]
    %v269 = vld [vmem:[#allocation11 + $0x4] sm:$0xf]
    %v270 = vld [vmem:[#allocation11 + $0x8] sm:$0xf]
    %v271 = vld [vmem:[#allocation11 + $0xc] sm:$0xf]
    %v272 = vld [vmem:[#allocation11 + $0x10] sm:$0xf]
    %v273 = vld [vmem:[#allocation11 + $0x14] sm:$0xf]
    %v274 = vld [vmem:[#allocation11 + $0x18] sm:$0xf]
    %v275 = vld [vmem:[#allocation11 + $0x1c] sm:$0xf]
    %v276 = vld [vmem:[#allocation13] sm:$0x1]
    %v278 = vlaneseq
    %v279 = vshrl.u32 %v278, 7
    %v280 = vsub.s32 0, %v279
    %v281 = vrot.slane %v276, %v280
    %v291 = vunpack.c.l.b16 %v268
    %v292 = vunpack.c.l.b16 %v269
    %v293 = vunpack.c.l.b16 %v270
    %v294 = vunpack.c.l.b16 %v271
    %v295 = vunpack.c.l.b16 %v272
    %v296 = vunpack.c.l.b16 %v273
    %v297 = vunpack.c.l.b16 %v274
    %v298 = vunpack.c.l.b16 %v275
    %v299 = vpack.c.b16 %v292, %v291
    %v300 = vpack.c.b16 %v294, %v293
    %v301 = vpack.c.b16 %v296, %v295
    %v302 = vpack.c.b16 %v298, %v297
    %vm307 = vcmask 523264
    %v309 = vsel %vm307, %v267, 0
    %311 = vmatprep.subr.bf16.mxu0 0
    %312 = vmatpush1.bf16.msra.mxu0 %v299
    %313 = vmatprep.subr.bf16.mxu0 0
    %314 = vmatpush1.bf16.msra.mxu0 %v300
    %315 = vmatprep.subr.bf16.mxu0 0
    %316 = vmatpush1.bf16.msra.mxu0 %v301
    %317 = vmatprep.subr.bf16.mxu0 0
    %318 = vmatpush1.bf16.msra.mxu0 %v302
    %319 = vmatprep.subr.bf16.mxu0 0
    %320 = vmatpush1.bf16.msra.mxu0 0
    %321 = vmatprep.subr.bf16.mxu0 0
    %322 = vmatpush1.bf16.msra.mxu0 0
    %323 = vmatprep.subr.bf16.mxu0 0
    %324 = vmatpush1.bf16.msra.mxu0 0
    %325 = vmatprep.subr.bf16.mxu0 0
    %326 = vmatpush1.bf16.msra.mxu0 0
    %327 = vmatprep.subr.bf16.mxu0 0
    %328 = vmatpush1.bf16.msra.mxu0 0
    %329 = vmatprep.subr.bf16.mxu0 0
    %330 = vmatpush1.bf16.msra.mxu0 0
    %331 = vmatprep.subr.bf16.mxu0 0
    %332 = vmatpush1.bf16.msra.mxu0 0
    %333 = vmatprep.subr.bf16.mxu0 0
    %334 = vmatpush1.bf16.msra.mxu0 0
    %335 = vmatprep.subr.bf16.mxu0 0
    %336 = vmatpush1.bf16.msra.mxu0 0
    %337 = vmatprep.subr.bf16.mxu0 0
    %338 = vmatpush1.bf16.msra.mxu0 0
    %339 = vmatprep.subr.bf16.mxu0 0
    %340 = vmatpush1.bf16.msra.mxu0 0
    %341 = vmatprep.subr.bf16.mxu0 0
    %342 = vmatpush1.bf16.msra.mxu0 0
    %343 = vmatprep.mubr.bf16.mxu0 0
    %344 = vmatmul.mubr.bf16.gmra.mrb[0].mxu0 %v309
    %v345 = vpop.f32.mrb[0].mxu0
    %v346 = vadd.f32 %v281, %v345
    %v347 = vpop.f32.mrb[0].mxu0
    %v348 = vpop.f32.mrb[0].mxu0
    %v349 = vadd.f32 %v281, %v348
    %v350 = vpop.f32.mrb[0].mxu0
    %351 = vdwg.mxu0
    %v352 = vsub.f32 0.0, %v346
    %v353 = vsub.f32 0.0, %v349
    %v354 = vmul.f32 %v352, 1.442695
    %v355 = vpow.pop %v354
    %v356 = vmul.f32 %v353, 1.442695
    %v357 = vpow.pop %v356
    %v358 = vadd.f32 %v355, 1.0
    %v359 = vadd.f32 %v357, 1.0
    %v360 = vrcp.pop %v358
    %v361 = vrcp.pop %v359
    %v362 = vmul.f32 %v360, %v119
    %v363 = vmul.f32 %v361, %v120
    %v364 = vsub.f32 1.0, %v360
    %v365 = vsub.f32 1.0, %v361
    %v366 = vmul.f32 %v364, %v121
    %v367 = vmul.f32 %v365, %v122
    %v368 = vadd.f32 %v362, %v366
    %v369 = vadd.f32 %v363, %v367
    %370 = vst.msk [vmem:[#allocation14] sm:$0xff] %vm145, %v368
    %371 = vst.msk [vmem:[#allocation14 + $0x8] sm:$0xff] %vm145, %v369
    // Predicated region
    $region58: #{tpu_custom_call.1} parent=1 // pred_check
      _
    $region59: #{tpu_custom_call.1} parent=1 // pred_check_branch
      %373 = sbr.rel (0) target = $region61
    $region60: #{tpu_custom_call.1} parent=1 // pred_region
      %s375 = ssub.s32 256, 256
      %376 = vsyncadd [#allocation4], %s375
      %s377 = sshll.u32 [#allocation14], 4
      %s378 = int_to_ptr.vmem [resolvable:$true] %s377
      %383 = dma.vmem_to_hbm [thread:$0]  %s378, 256, %s7, [#allocation4], 128, 128, 8
    $region61: #{tpu_custom_call.1} parent=1 // pred_fallthru
      _
    // Predicated region
    $region62: #{tpu_custom_call.1} parent=1 // pred_check
      _
    $region63: #{tpu_custom_call.1} parent=1 // pred_check_branch
      %385 = sbr.rel (0) target = $region65
    $region64: #{tpu_custom_call.1} parent=1 // pred_region
      %386 = dma.done [#allocation4], 256
    $region65: #{tpu_custom_call.1} parent=1 // pred_fallthru
      _
    %387 = vsyncpa [#allocation3], 1
    %388 = vsyncpa [#allocation6], 1
    %389 = vsyncpa [#allocation9], 1
    %390 = vsyncpa [#allocation12], 1
    %391 = vsyncpa [#allocation4], 1

</llo_original>
